<compile_context>
chip_gen: v7x
topology: tpu7x:2x2x1
jax: 0.10.0
libtpu: 0.0.40
codegen_flags: <defaults>
</compile_context>

<pallas_src>
import jax
import jax.numpy as jnp
from jax import lax
from jax.experimental import pallas as pl
from jax.experimental.pallas import tpu as pltpu


def _smooth_l1(x):
    # torch.nn.functional.smooth_l1_loss with beta=1.0 (default), element-wise.
    ax = jnp.abs(x)
    return jnp.where(ax < 1.0, 0.5 * x * x, ax - 0.5)


def _kalman_sums_kernel(pred_ref, target_ref, fc_ref, mask_ref,
                        pred_out, sm_out, fc_out,
                        pred_acc, sm_acc, fc_acc):
    k = pl.program_id(1)

    @pl.when(k == 0)
    def _init():
        pred_acc[...] = jnp.zeros_like(pred_acc)
        sm_acc[...] = jnp.zeros_like(sm_acc)
        fc_acc[...] = jnp.zeros_like(fc_acc)

    pred = pred_ref[...].astype(jnp.float32)       # [tb, Lp] lane-dense
    target = target_ref[...].astype(jnp.float32)   # [tb, Lp]
    mask = mask_ref[...].astype(jnp.float32)       # int8 {0,1} -> f32

    # Forecast arrives un-shifted (lane s*4+c holds the prediction for step
    # s+1); a lane roll by 4 aligns it with target step s.  The 4 lanes that
    # wrap into t=0 are zero pad (Lp >= 4*S, asserted in the wrapper) and are
    # additionally killed by fmask.
    forecast = pltpu.roll(fc_ref[...].astype(jnp.float32), shift=4, axis=1)

    # Static lane guard: smoothness / forecast terms only exist for t >= 1.
    lane = lax.broadcasted_iota(jnp.int32, mask.shape, 1)
    keep = (lane >= 4).astype(jnp.float32)
    fmask = mask * keep                              # mask[:, 1:] aligned at t
    prev_mask = pltpu.roll(mask, shift=4, axis=1)    # mask[:, :-1] aligned at t
    diff_mask = fmask * prev_mask                    # AND of the {0,1} masks

    d = pred - target
    dd = d - pltpu.roll(d, shift=4, axis=1)          # d[t] - d[t-1]

    # Pure-VPU per-element accumulation; XLU reductions are deferred.
    pred_acc[...] += _smooth_l1(d) * mask
    sm_acc[...] += _smooth_l1(dd) * diff_mask
    fc_acc[...] += _smooth_l1(forecast - target) * fmask

    @pl.when(k == pl.num_programs(1) - 1)
    def _finalize():
        # One sublane reduce per term, once per parallel slice; the cross-lane
        # reduce / divides / weighting happen in the wrapper (XLA, tiny).
        pred_out[...] = jnp.sum(pred_acc[...], axis=0, keepdims=True)[None]
        sm_out[...] = jnp.sum(sm_acc[...], axis=0, keepdims=True)[None]
        fc_out[...] = jnp.sum(fc_acc[...], axis=0, keepdims=True)[None]


def _pick_batch_tile(batch, cap_rows):
    """Pick (tile_rows, padded_batch). Tiles are multiples of 32 (int8-safe)."""
    if batch <= cap_rows:
        return batch, batch
    base = max(32, (cap_rows // 32) * 32)
    t = base
    while t >= max(32, base // 2):           # prefer an exact divisor (no row pad)
        if batch % t == 0:
            return t, batch
        t -= 32
    padded = ((batch + base - 1) // base) * base
    return base, padded


def _kalman_loss_ref(pred, target, forecast, mask, pw=1.0, sw=0.1, fw=2.0):
    """Plain-JAX reference mirroring the PyTorch module (for verification)."""
    m = mask.astype(jnp.float32)
    m3 = m[:, :, None]
    pred_l = jnp.sum(_smooth_l1(pred * m3 - target * m3))
    nv = jnp.sum(m)
    pred_l = jnp.where(nv > 0, pred_l / jnp.maximum(nv, 1.0), pred_l)

    md = m[:, 1:] * m[:, :-1]
    md3 = md[:, :, None]
    sm_l = jnp.sum(_smooth_l1((pred[:, 1:] - pred[:, :-1]) * md3
                              - (target[:, 1:] - target[:, :-1]) * md3))
    nd = jnp.sum(md)
    sm_l = jnp.where(nd > 0, sm_l / jnp.maximum(nd, 1.0), 0.0)

    mf3 = m[:, 1:, None]
    fc_l = jnp.sum(_smooth_l1(forecast * mf3 - target[:, 1:] * mf3))
    nf = jnp.sum(m[:, 1:])
    fc_l = jnp.where(nf > 0, fc_l / jnp.maximum(nf, 1.0), 0.0)
    return pw * pred_l + sw * sm_l + fw * fc_l


def kalman_loss(pred_boxes, target_boxes, prediction_only_boxes=None, valid_mask=None,
                prediction_weight=1.0, smoothness_weight=0.1, forecast_weight=2.0):
    """Pallas TPU implementation of KalmanLoss.forward."""
    B, S, C = pred_boxes.shape
    assert C == 4

    if valid_mask is None:
        valid_mask = jnp.ones((B, S), dtype=jnp.bool_)
    fw_eff = float(forecast_weight)
    if prediction_only_boxes is None:
        prediction_only_boxes = jnp.zeros((B, max(S - 1, 0), C), pred_boxes.dtype)
        fw_eff = 0.0
    assert prediction_only_boxes.shape == (B, S - 1, C)
    assert valid_mask.shape == (B, S)

    L = S * C
    Lp = max(128, ((L + 127) // 128) * 128)   # lane-dense 128-multiple slab
    # The in-kernel forecast roll wraps the last 4 lanes into t==0; they must be
    # zero pad, which holds iff Lp >= L (forecast data ends at lane L-5).
    assert Lp >= L

    def _flat(x, width):                      # [B, width] -> [B, Lp], zero-padded
        x2 = x.reshape(B, width)
        if width < Lp:
            x2 = jnp.pad(x2, ((0, 0), (0, Lp - width)))
        return x2

    pred_flat = _flat(pred_boxes, L)                               # native dtype
    target_flat = _flat(target_boxes, L)
    fc_flat = _flat(prediction_only_boxes, L - C)                  # no front pad
    mask_flat = _flat(jnp.repeat(valid_mask.astype(jnp.int8), C, axis=1), L)

    # Mask counts: trivial XLA reductions on the small [B, S] mask.
    m = valid_mask.astype(jnp.float32)
    num_valid = jnp.sum(m)
    if S > 1:
        num_diff = jnp.sum(m[:, 1:] * m[:, :-1])
        num_fc = jnp.sum(m[:, 1:])
    else:
        num_diff = jnp.float32(0.0)
        num_fc = jnp.float32(0.0)

    # Generation-aware VMEM budget -> batch tile (conservative: stays inside
    # the scoped-VMEM defaults on v5e/v6e/v7x without setting vmem_limit_bytes).
    try:
        info = pltpu.get_tpu_info()
        phys_vmem = int(getattr(info, "vmem_capacity_bytes", 64 << 20))
    except Exception:
        phys_vmem = 64 << 20
    budget = min(phys_vmem // 4, 12 << 20)
    in_bytes_per_row = Lp * (pred_flat.dtype.itemsize + target_flat.dtype.itemsize
                             + fc_flat.dtype.itemsize + mask_flat.dtype.itemsize)
    row_bytes = in_bytes_per_row * 2 + Lp * 4 * 3   # 2x pipelined inputs + f32 accs
    cap_rows = max(32, (budget // row_bytes) // 32 * 32)

    tb, Bp = _pick_batch_tile(B, cap_rows)
    if Bp > B:
        padr = ((0, Bp - B), (0, 0))                # zero rows contribute 0
        pred_flat = jnp.pad(pred_flat, padr)
        target_flat = jnp.pad(target_flat, padr)
        fc_flat = jnp.pad(fc_flat, padr)
        mask_flat = jnp.pad(mask_flat, padr)

    total_steps = Bp // tb
    num_par = 2 if (total_steps >= 2 and total_steps % 2 == 0) else 1
    n_inner = total_steps // num_par
    grid = (num_par, n_inner)

    def in_map(i, k):
        return (i * n_inner + k, 0)

    out_sds = jax.ShapeDtypeStruct((num_par, 1, Lp), jnp.float32)
    out_spec = pl.BlockSpec((1, 1, Lp), lambda i, k: (i, 0, 0))

    pred_part, sm_part, fc_part = pl.pallas_call(
        _kalman_sums_kernel,
        out_shape=(out_sds, out_sds, out_sds),
        grid=grid,
        in_specs=[pl.BlockSpec((tb, Lp), in_map)] * 4,
        out_specs=(out_spec, out_spec, out_spec),
        scratch_shapes=[pltpu.VMEM((tb, Lp), jnp.float32)] * 3,
        compiler_params=pltpu.CompilerParams(
            dimension_semantics=("parallel", "arbitrary")),
    )(pred_flat, target_flat, fc_flat, mask_flat)

    # Every partial sum is exactly 0 when its count is 0, so max(count, 1)
    # reproduces the PyTorch zero-count fall-backs without 0/0 NaN.
    pred_loss = jnp.sum(pred_part) / jnp.maximum(num_valid, 1.0)
    smooth_loss = jnp.sum(sm_part) / jnp.maximum(num_diff, 1.0)
    fc_loss = jnp.sum(fc_part) / jnp.maximum(num_fc, 1.0)
    return (prediction_weight * pred_loss
            + smoothness_weight * smooth_loss
            + fw_eff * fc_loss)


if __name__ == "__main__":
    key = jax.random.PRNGKey(0)
    k1, k2, k3, k4 = jax.random.split(key, 4)

    # Primary case: S*4 is exactly 128 lanes.
    B, S = 2, 32
    pred_boxes = jax.random.normal(k1, (B, S, 4), dtype=jnp.float32)
    target_boxes = pred_boxes + 0.5 * jax.random.normal(k2, (B, S, 4), dtype=jnp.float32)
    prediction_only_boxes = target_boxes[:, 1:, :] + \
        0.3 * jax.random.normal(k3, (B, S - 1, 4), dtype=jnp.float32)
    valid_mask = (jax.random.uniform(k4, (B, S)) > 0.2)

    loss = jax.block_until_ready(
        kalman_loss(pred_boxes, target_boxes, prediction_only_boxes, valid_mask))
    ref = _kalman_loss_ref(pred_boxes, target_boxes, prediction_only_boxes, valid_mask)
    assert jnp.allclose(loss, ref, rtol=1e-4, atol=1e-5), (loss, ref)

    # Secondary case: ragged S (lane padding + in-kernel roll over pad lanes).
    kk = jax.random.split(jax.random.PRNGKey(1), 4)
    B2, S2 = 3, 9
    p2 = jax.random.normal(kk[0], (B2, S2, 4), dtype=jnp.float32)
    t2 = p2 + 0.5 * jax.random.normal(kk[1], (B2, S2, 4), dtype=jnp.float32)
    f2 = t2[:, 1:, :] + 0.3 * jax.random.normal(kk[2], (B2, S2 - 1, 4), dtype=jnp.float32)
    m2 = (jax.random.uniform(kk[3], (B2, S2)) > 0.3)
    loss2 = jax.block_until_ready(kalman_loss(p2, t2, f2, m2))
    ref2 = _kalman_loss_ref(p2, t2, f2, m2)
    assert jnp.allclose(loss2, ref2, rtol=1e-4, atol=1e-5), (loss2, ref2)

    print("KERNEL_OK")
</pallas_src>

<mosaic_0001>
module attributes {stable_mosaic.version = 11 : i64} {
  func.func @_kalman_sums_kernel(%arg0: i32, %arg1: i32, %arg2: memref<2x128xf32, #tpu.memory_space<vmem>>, %arg3: memref<2x128xf32, #tpu.memory_space<vmem>>, %arg4: memref<2x128xf32, #tpu.memory_space<vmem>>, %arg5: memref<2x128xi8, #tpu.memory_space<vmem>>, %arg6: memref<1x1x128xf32, #tpu.memory_space<vmem>>, %arg7: memref<1x1x128xf32, #tpu.memory_space<vmem>>, %arg8: memref<1x1x128xf32, #tpu.memory_space<vmem>>, %arg9: memref<2x128xf32, #tpu.memory_space<vmem>>, %arg10: memref<2x128xf32, #tpu.memory_space<vmem>>, %arg11: memref<2x128xf32, #tpu.memory_space<vmem>>) attributes {dimension_semantics = [#tpu.dimension_semantics<parallel>, #tpu.dimension_semantics<arbitrary>], iteration_bounds = array<i64: 1, 1>, scalar_prefetch = 0 : i64, scratch_operands = 3 : i64, tpu.core_type = #tpu.core_type<tc>, window_params = [{transform_indices = @transform_0, window_bounds = array<i64: 2, 128>}, {transform_indices = @transform_1, window_bounds = array<i64: 2, 128>}, {transform_indices = @transform_2, window_bounds = array<i64: 2, 128>}, {transform_indices = @transform_3, window_bounds = array<i64: 2, 128>}, {transform_indices = @transform_4, window_bounds = array<i64: 1, 1, 128>}, {transform_indices = @transform_5, window_bounds = array<i64: 1, 1, 128>}, {transform_indices = @transform_6, window_bounds = array<i64: 1, 1, 128>}]} {
    %c0_i32 = arith.constant 0 : i32
    %0 = arith.cmpi eq, %arg1, %c0_i32 : i32
    %1 = arith.extui %0 : i1 to i32
    %c0_i32_0 = arith.constant 0 : i32
    %2 = arith.cmpi ne, %1, %c0_i32_0 : i32
    scf.if %2 {
      %cst_33 = arith.constant 0.000000e+00 : f32
      %63 = vector.broadcast %cst_33 : f32 to vector<2x128xf32>
      %c0_34 = arith.constant 0 : index
      %c0_35 = arith.constant 0 : index
      %64 = vector.load %arg9[%c0_34, %c0_35] : memref<2x128xf32, #tpu.memory_space<vmem>>, vector<2x128xf32>
      tpu.vector_store %arg9[%c0_34, %c0_35], %63 {strides = array<i32>} : memref<2x128xf32, #tpu.memory_space<vmem>>, vector<2x128xf32>,
      %cst_36 = arith.constant 0.000000e+00 : f32
      %65 = vector.broadcast %cst_36 : f32 to vector<2x128xf32>
      %c0_37 = arith.constant 0 : index
      %c0_38 = arith.constant 0 : index
      %66 = vector.load %arg10[%c0_37, %c0_38] : memref<2x128xf32, #tpu.memory_space<vmem>>, vector<2x128xf32>
      tpu.vector_store %arg10[%c0_37, %c0_38], %65 {strides = array<i32>} : memref<2x128xf32, #tpu.memory_space<vmem>>, vector<2x128xf32>,
      %cst_39 = arith.constant 0.000000e+00 : f32
      %67 = vector.broadcast %cst_39 : f32 to vector<2x128xf32>
      %c0_40 = arith.constant 0 : index
      %c0_41 = arith.constant 0 : index
      %68 = vector.load %arg11[%c0_40, %c0_41] : memref<2x128xf32, #tpu.memory_space<vmem>>, vector<2x128xf32>
      tpu.vector_store %arg11[%c0_40, %c0_41], %67 {strides = array<i32>} : memref<2x128xf32, #tpu.memory_space<vmem>>, vector<2x128xf32>,
    } else {
    }
    %c0 = arith.constant 0 : index
    %c0_1 = arith.constant 0 : index
    %3 = vector.load %arg2[%c0, %c0_1] : memref<2x128xf32, #tpu.memory_space<vmem>>, vector<2x128xf32>
    %c0_2 = arith.constant 0 : index
    %c0_3 = arith.constant 0 : index
    %4 = vector.load %arg3[%c0_2, %c0_3] : memref<2x128xf32, #tpu.memory_space<vmem>>, vector<2x128xf32>
    %c0_4 = arith.constant 0 : index
    %c0_5 = arith.constant 0 : index
    %5 = vector.load %arg5[%c0_4, %c0_5] : memref<2x128xi8, #tpu.memory_space<vmem>>, vector<2x128xi8>
    %6 = arith.sitofp %5 : vector<2x128xi8> to vector<2x128xf32>
    %c0_6 = arith.constant 0 : index
    %c0_7 = arith.constant 0 : index
    %7 = vector.load %arg4[%c0_6, %c0_7] : memref<2x128xf32, #tpu.memory_space<vmem>>, vector<2x128xf32>
    %c4_i32 = arith.constant 4 : i32
    %8 = tpu.dynamic_rotate %7 by %c4_i32 dim 1 : vector<2x128xf32>, i32 -> vector<2x128xf32>
    %9 = tpu.iota {dimensions = array<i32: 1>} : vector<2x128xi32>
    %c4_i32_8 = arith.constant 4 : i32
    %10 = vector.broadcast %c4_i32_8 : i32 to vector<2x128xi32>
    %11 = arith.cmpi sge, %9, %10 : vector<2x128xi32>
    %12 = arith.extui %11 : vector<2x128xi1> to vector<2x128xi32>
    %13 = arith.sitofp %12 : vector<2x128xi32> to vector<2x128xf32>
    %14 = arith.mulf %6, %13 : vector<2x128xf32>
    %c4_i32_9 = arith.constant 4 : i32
    %15 = tpu.dynamic_rotate %6 by %c4_i32_9 dim 1 : vector<2x128xf32>, i32 -> vector<2x128xf32>
    %16 = arith.mulf %14, %15 : vector<2x128xf32>
    %17 = arith.subf %3, %4 : vector<2x128xf32>
    %c4_i32_10 = arith.constant 4 : i32
    %18 = tpu.dynamic_rotate %17 by %c4_i32_10 dim 1 : vector<2x128xf32>, i32 -> vector<2x128xf32>
    %19 = arith.subf %17, %18 : vector<2x128xf32>
    %c0_11 = arith.constant 0 : index
    %c0_12 = arith.constant 0 : index
    %20 = vector.load %arg9[%c0_11, %c0_12] : memref<2x128xf32, #tpu.memory_space<vmem>>, vector<2x128xf32>
    %21 = math.absf %17 : vector<2x128xf32>
    %cst = arith.constant 1.000000e+00 : f32
    %22 = vector.broadcast %cst : f32 to vector<2x128xf32>
    %23 = arith.cmpf olt, %21, %22 : vector<2x128xf32>
    %cst_13 = arith.constant 5.000000e-01 : f32
    %24 = vector.broadcast %cst_13 : f32 to vector<2x128xf32>
    %25 = arith.mulf %24, %17 : vector<2x128xf32>
    %26 = arith.mulf %25, %17 : vector<2x128xf32>
    %cst_14 = arith.constant 5.000000e-01 : f32
    %27 = vector.broadcast %cst_14 : f32 to vector<2x128xf32>
    %28 = arith.subf %21, %27 : vector<2x128xf32>
    %29 = arith.select %23, %26, %28 : vector<2x128xi1>, vector<2x128xf32>
    %30 = arith.mulf %29, %6 : vector<2x128xf32>
    %31 = arith.addf %20, %30 : vector<2x128xf32>
    %c0_15 = arith.constant 0 : index
    %c0_16 = arith.constant 0 : index
    %32 = vector.load %arg9[%c0_15, %c0_16] : memref<2x128xf32, #tpu.memory_space<vmem>>, vector<2x128xf32>
    tpu.vector_store %arg9[%c0_15, %c0_16], %31 {strides = array<i32>} : memref<2x128xf32, #tpu.memory_space<vmem>>, vector<2x128xf32>,
    %c0_17 = arith.constant 0 : index
    %c0_18 = arith.constant 0 : index
    %33 = vector.load %arg10[%c0_17, %c0_18] : memref<2x128xf32, #tpu.memory_space<vmem>>, vector<2x128xf32>
    %34 = math.absf %19 : vector<2x128xf32>
    %cst_19 = arith.constant 1.000000e+00 : f32
    %35 = vector.broadcast %cst_19 : f32 to vector<2x128xf32>
    %36 = arith.cmpf olt, %34, %35 : vector<2x128xf32>
    %cst_20 = arith.constant 5.000000e-01 : f32
    %37 = vector.broadcast %cst_20 : f32 to vector<2x128xf32>
    %38 = arith.mulf %37, %19 : vector<2x128xf32>
    %39 = arith.mulf %38, %19 : vector<2x128xf32>
    %cst_21 = arith.constant 5.000000e-01 : f32
    %40 = vector.broadcast %cst_21 : f32 to vector<2x128xf32>
    %41 = arith.subf %34, %40 : vector<2x128xf32>
    %42 = arith.select %36, %39, %41 : vector<2x128xi1>, vector<2x128xf32>
    %43 = arith.mulf %42, %16 : vector<2x128xf32>
    %44 = arith.addf %33, %43 : vector<2x128xf32>
    %c0_22 = arith.constant 0 : index
    %c0_23 = arith.constant 0 : index
    %45 = vector.load %arg10[%c0_22, %c0_23] : memref<2x128xf32, #tpu.memory_space<vmem>>, vector<2x128xf32>
    tpu.vector_store %arg10[%c0_22, %c0_23], %44 {strides = array<i32>} : memref<2x128xf32, #tpu.memory_space<vmem>>, vector<2x128xf32>,
    %c0_24 = arith.constant 0 : index
    %c0_25 = arith.constant 0 : index
    %46 = vector.load %arg11[%c0_24, %c0_25] : memref<2x128xf32, #tpu.memory_space<vmem>>, vector<2x128xf32>
    %47 = arith.subf %8, %4 : vector<2x128xf32>
    %48 = math.absf %47 : vector<2x128xf32>
    %cst_26 = arith.constant 1.000000e+00 : f32
    %49 = vector.broadcast %cst_26 : f32 to vector<2x128xf32>
    %50 = arith.cmpf olt, %48, %49 : vector<2x128xf32>
    %cst_27 = arith.constant 5.000000e-01 : f32
    %51 = vector.broadcast %cst_27 : f32 to vector<2x128xf32>
    %52 = arith.mulf %51, %47 : vector<2x128xf32>
    %53 = arith.mulf %52, %47 : vector<2x128xf32>
    %cst_28 = arith.constant 5.000000e-01 : f32
    %54 = vector.broadcast %cst_28 : f32 to vector<2x128xf32>
    %55 = arith.subf %48, %54 : vector<2x128xf32>
    %56 = arith.select %50, %53, %55 : vector<2x128xi1>, vector<2x128xf32>
    %57 = arith.mulf %56, %14 : vector<2x128xf32>
    %58 = arith.addf %46, %57 : vector<2x128xf32>
    %c0_29 = arith.constant 0 : index
    %c0_30 = arith.constant 0 : index
    %59 = vector.load %arg11[%c0_29, %c0_30] : memref<2x128xf32, #tpu.memory_space<vmem>>, vector<2x128xf32>
    tpu.vector_store %arg11[%c0_29, %c0_30], %58 {strides = array<i32>} : memref<2x128xf32, #tpu.memory_space<vmem>>, vector<2x128xf32>,
    %c0_i32_31 = arith.constant 0 : i32
    %60 = arith.cmpi eq, %arg1, %c0_i32_31 : i32
    %61 = arith.extui %60 : i1 to i32
    %c0_i32_32 = arith.constant 0 : i32
    %62 = arith.cmpi ne, %61, %c0_i32_32 : i32
    scf.if %62 {
      %c0_33 = arith.constant 0 : index
      %c0_34 = arith.constant 0 : index
      %63 = vector.load %arg9[%c0_33, %c0_34] : memref<2x128xf32, #tpu.memory_space<vmem>>, vector<2x128xf32>
      %cst_35 = arith.constant dense<0.000000e+00> : vector<128xf32>
      %64 = vector.multi_reduction <add>, %63, %cst_35 [0] : vector<2x128xf32> to vector<128xf32>
      %65 = vector.shape_cast %64 : vector<128xf32> to vector<1x128xf32>
      %66 = vector.shape_cast %65 : vector<1x128xf32> to vector<1x1x128xf32>
      %c0_36 = arith.constant 0 : index
      %c0_37 = arith.constant 0 : index
      %c0_38 = arith.constant 0 : index
      %67 = vector.load %arg6[%c0_36, %c0_37, %c0_38] : memref<1x1x128xf32, #tpu.memory_space<vmem>>, vector<1x1x128xf32>
      tpu.vector_store %arg6[%c0_36, %c0_37, %c0_38], %66 {strides = array<i32>} : memref<1x1x128xf32, #tpu.memory_space<vmem>>, vector<1x1x128xf32>,
      %c0_39 = arith.constant 0 : index
      %c0_40 = arith.constant 0 : index
      %68 = vector.load %arg10[%c0_39, %c0_40] : memref<2x128xf32, #tpu.memory_space<vmem>>, vector<2x128xf32>
      %cst_41 = arith.constant dense<0.000000e+00> : vector<128xf32>
      %69 = vector.multi_reduction <add>, %68, %cst_41 [0] : vector<2x128xf32> to vector<128xf32>
      %70 = vector.shape_cast %69 : vector<128xf32> to vector<1x128xf32>
      %71 = vector.shape_cast %70 : vector<1x128xf32> to vector<1x1x128xf32>
      %c0_42 = arith.constant 0 : index
      %c0_43 = arith.constant 0 : index
      %c0_44 = arith.constant 0 : index
      %72 = vector.load %arg7[%c0_42, %c0_43, %c0_44] : memref<1x1x128xf32, #tpu.memory_space<vmem>>, vector<1x1x128xf32>
      tpu.vector_store %arg7[%c0_42, %c0_43, %c0_44], %71 {strides = array<i32>} : memref<1x1x128xf32, #tpu.memory_space<vmem>>, vector<1x1x128xf32>,
      %c0_45 = arith.constant 0 : index
      %c0_46 = arith.constant 0 : index
      %73 = vector.load %arg11[%c0_45, %c0_46] : memref<2x128xf32, #tpu.memory_space<vmem>>, vector<2x128xf32>
      %cst_47 = arith.constant dense<0.000000e+00> : vector<128xf32>
      %74 = vector.multi_reduction <add>, %73, %cst_47 [0] : vector<2x128xf32> to vector<128xf32>
      %75 = vector.shape_cast %74 : vector<128xf32> to vector<1x128xf32>
      %76 = vector.shape_cast %75 : vector<1x128xf32> to vector<1x1x128xf32>
      %c0_48 = arith.constant 0 : index
      %c0_49 = arith.constant 0 : index
      %c0_50 = arith.constant 0 : index
      %77 = vector.load %arg8[%c0_48, %c0_49, %c0_50] : memref<1x1x128xf32, #tpu.memory_space<vmem>>, vector<1x1x128xf32>
      tpu.vector_store %arg8[%c0_48, %c0_49, %c0_50], %76 {strides = array<i32>} : memref<1x1x128xf32, #tpu.memory_space<vmem>>, vector<1x1x128xf32>,
    } else {
    }
    return
  }
  func.func @transform_0(%arg0: i32, %arg1: i32) -> (i32, i32) {
    %c1_i32 = arith.constant 1 : i32
    %0 = arith.muli %arg0, %c1_i32 : i32
    %1 = arith.addi %0, %arg1 : i32
    %c0_i32 = arith.constant 0 : i32
    %c0_i32_0 = arith.constant 0 : i32
    return %1, %c0_i32 : i32, i32
  }
  func.func @transform_1(%arg0: i32, %arg1: i32) -> (i32, i32) {
    %c1_i32 = arith.constant 1 : i32
    %0 = arith.muli %arg0, %c1_i32 : i32
    %1 = arith.addi %0, %arg1 : i32
    %c0_i32 = arith.constant 0 : i32
    %c0_i32_0 = arith.constant 0 : i32
    return %1, %c0_i32 : i32, i32
  }
  func.func @transform_2(%arg0: i32, %arg1: i32) -> (i32, i32) {
    %c1_i32 = arith.constant 1 : i32
    %0 = arith.muli %arg0, %c1_i32 : i32
    %1 = arith.addi %0, %arg1 : i32
    %c0_i32 = arith.constant 0 : i32
    %c0_i32_0 = arith.constant 0 : i32
    return %1, %c0_i32 : i32, i32
  }
  func.func @transform_3(%arg0: i32, %arg1: i32) -> (i32, i32) {
    %c1_i32 = arith.constant 1 : i32
    %0 = arith.muli %arg0, %c1_i32 : i32
    %1 = arith.addi %0, %arg1 : i32
    %c0_i32 = arith.constant 0 : i32
    %c0_i32_0 = arith.constant 0 : i32
    return %1, %c0_i32 : i32, i32
  }
  func.func @transform_4(%arg0: i32, %arg1: i32) -> (i32, i32, i32) {
    %c0_i32 = arith.constant 0 : i32
    %c0_i32_0 = arith.constant 0 : i32
    %c0_i32_1 = arith.constant 0 : i32
    return %arg0, %c0_i32, %c0_i32_0 : i32, i32, i32
  }
  func.func @transform_5(%arg0: i32, %arg1: i32) -> (i32, i32, i32) {
    %c0_i32 = arith.constant 0 : i32
    %c0_i32_0 = arith.constant 0 : i32
    %c0_i32_1 = arith.constant 0 : i32
    return %arg0, %c0_i32, %c0_i32_0 : i32, i32, i32
  }
  func.func @transform_6(%arg0: i32, %arg1: i32) -> (i32, i32, i32) {
    %c0_i32 = arith.constant 0 : i32
    %c0_i32_0 = arith.constant 0 : i32
    %c0_i32_1 = arith.constant 0 : i32
    return %arg0, %c0_i32, %c0_i32_0 : i32, i32, i32
  }
}

</mosaic_0001>

<llo_original>
// kernel: tpu_custom_call.1
$region0: #{tpu_custom_call.1}
  #allocation0 [shape = 'u32[]', space=smem, size = 0x4, offset = 0x4, fixed_abs, tag = 'smem constant byte address 0x4 - core index']
  #allocation1 [shape = 'u32[144,128]{1,0:T(1,128)}', space=vmem, size = 0x12000, scoped, tag = 'internal scratch']
  #allocation2 [shape = 'f32[2,128]{1,0:T(2,128)}', space=vmem, size = 0x400, scoped, tag = 'scratch operand']
  #allocation3 [shape = 'f32[2,128]{1,0:T(2,128)}', space=vmem, size = 0x400, scoped, tag = 'scratch operand']
  #allocation4 [shape = 'f32[2,128]{1,0:T(2,128)}', space=vmem, size = 0x400, scoped, tag = 'scratch operand']
  %s0 = inlined_call_operand.hbm [shape: f32[2,128], index: 0, kind: input, shape index: {}]
  %s1 = inlined_call_operand.vmem [shape: f32[2,128], index: 1, kind: input, shape index: {}]
  %s2 = inlined_call_operand.vmem [shape: f32[2,128], index: 2, kind: input, shape index: {}]
  %s3 = inlined_call_operand.vmem [shape: s8[2,128], index: 3, kind: input, shape index: {}]
  %s4 = inlined_call_operand.hbm [shape: f32[1,1,128], index: 4, kind: output, shape index: {0}]
  %s5 = inlined_call_operand.hbm [shape: f32[1,1,128], index: 5, kind: output, shape index: {1}]
  %s6 = inlined_call_operand.hbm [shape: f32[1,1,128], index: 6, kind: output, shape index: {2}]
  %7 = xla_tuple %s4, %s5, %s6
  %s8 = sld [smem:[#allocation0]]
  $region54: #{tpu_custom_call.1} parent=0
    _
  %s10 = ssub.s32 1, %s8
  %s11 = scalar_select 0, %s10, %s8
  $region1: #{tpu_custom_call.1} parent=0
    #allocation5 [shape = 'u8[1024]{0}', space=vmem, size = 0x400, scoped, tag = 'input window, operand 0, single buffered']
    #allocation6 [shape = 's32[1]{0}', space=sflag, size = 0x4, scoped, tag = 'scoped memory for tpu_custom_call.1']
    #allocation7 [shape = 's32[1]{0}', space=sflag, size = 0x4, scoped, tag = 'scoped memory for tpu_custom_call.1']
    #allocation8 [shape = 'u8[512]{0}', space=vmem, size = 0x400, scoped, tag = 'output window, operand 0, single buffered']
    #allocation9 [shape = 'u8[512]{0}', space=vmem, size = 0x400, scoped, tag = 'output window, operand 1, single buffered']
    #allocation10 [shape = 's32[1]{0}', space=sflag, size = 0x4, scoped, tag = 'scoped memory for tpu_custom_call.1']
    #allocation11 [shape = 'u8[512]{0}', space=vmem, size = 0x400, scoped, tag = 'output window, operand 2, single buffered']
    %12 = vsyncpa [#allocation6], 0
    %13 = vsyncpa [#allocation7], 0
    %14 = vsyncpa [#allocation10], 0
    // Predicated region
    $region2: #{tpu_custom_call.1} parent=1 // pred_check
      _
    $region3: #{tpu_custom_call.1} parent=1 // pred_check_branch
      %16 = sbr.rel (0) target = $region5
    $region4: #{tpu_custom_call.1} parent=1 // pred_region
      %s17 = sadd.s32 0, 0
      %s19 = ssub.s32 32, 32
      %20 = vsyncadd [#allocation6], %s19
      %s21 = smul.addr %s17, 32
      %s22 = scalar_lea.hbm %s0, %s21
      %s24 = sshll.u32 [#allocation5], 4
      %s25 = int_to_ptr.vmem [resolvable:$true] %s24
      %27 = dma.hbm_to_vmem [thread:$0]  %s22, 32, %s25, [#allocation6]
    $region5: #{tpu_custom_call.1} parent=1 // pred_fallthru
      _
    // Predicated region
    $region6: #{tpu_custom_call.1} parent=1 // pred_check
      _
    $region7: #{tpu_custom_call.1} parent=1 // pred_check_branch
      %29 = sbr.rel (0) target = $region9
    $region8: #{tpu_custom_call.1} parent=1 // pred_region
      %s30 = sadd.s32 0, 0
      %p31 = scmp.lt.s32.totalorder %s30, 0
      %s32 = scalar_select %p31, %s30, 0
      %s33 = smul.addr %s32, 2
      %s34 = scalar_lea.vmem %s1, %s33
      %s35 = sadd.s32 0, 0
    $region9: #{tpu_custom_call.1} parent=1 // pred_fallthru
      _
    // Predicated region
    $region10: #{tpu_custom_call.1} parent=1 // pred_check
      _
    $region11: #{tpu_custom_call.1} parent=1 // pred_check_branch
      %37 = sbr.rel (0) target = $region13
    $region12: #{tpu_custom_call.1} parent=1 // pred_region
      %s38 = sadd.s32 0, 0
      %p39 = scmp.lt.s32.totalorder %s38, 0
      %s40 = scalar_select %p39, %s38, 0
      %s41 = smul.addr %s40, 2
      %s42 = scalar_lea.vmem %s2, %s41
      %s43 = sadd.s32 0, 0
    $region13: #{tpu_custom_call.1} parent=1 // pred_fallthru
      _
    // Predicated region
    $region14: #{tpu_custom_call.1} parent=1 // pred_check
      _
    $region15: #{tpu_custom_call.1} parent=1 // pred_check_branch
      %45 = sbr.rel (0) target = $region17
    $region16: #{tpu_custom_call.1} parent=1 // pred_region
      %s46 = sadd.s32 0, 0
      %p47 = scmp.lt.s32.totalorder %s46, 0
      %s48 = scalar_select %p47, %s46, 0
      %s49 = scalar_lea.vmem %s3, %s48
      %s50 = sadd.s32 0, 0
    $region17: #{tpu_custom_call.1} parent=1 // pred_fallthru
      _
    // Predicated region
    $region18: #{tpu_custom_call.1} parent=1 // pred_check
      _
    $region19: #{tpu_custom_call.1} parent=1 // pred_check_branch
      %52 = sbr.rel (0) target = $region21
    $region20: #{tpu_custom_call.1} parent=1 // pred_region
      %53 = dma.done [#allocation6], 32
    $region21: #{tpu_custom_call.1} parent=1 // pred_fallthru
      _
    %s54 = sadd.s32 0, 0
    %p55 = scmp.lt.s32.totalorder %s54, 0
    %s56 = scalar_select %p55, %s54, 0
    %s57 = smul.addr %s56, 2
    %s58 = scalar_lea.vmem %s1, %s57
    %s59 = sadd.s32 0, 0
    %p60 = scmp.lt.s32.totalorder %s59, 0
    %s61 = scalar_select %p60, %s59, 0
    %s62 = smul.addr %s61, 2
    %s63 = scalar_lea.vmem %s2, %s62
    %s64 = sadd.s32 0, 0
    %p65 = scmp.lt.s32.totalorder %s64, 0
    %s66 = scalar_select %p65, %s64, 0
    %s67 = scalar_lea.vmem %s3, %s66
    %s68 = sadd.s32 0, 0
    %s69 = sadd.s32 0, 0
    %p70 = scmp.lt.s32.totalorder %s69, 0
    %s71 = scalar_select %p70, %s69, 0
    %s72 = smul.addr %s71, 2
    %s73 = scalar_lea.vmem %s1, %s72
    %s74 = sadd.s32 0, 0
    %s75 = sadd.s32 0, 0
    %p76 = scmp.lt.s32.totalorder %s75, 0
    %s77 = scalar_select %p76, %s75, 0
    %s78 = smul.addr %s77, 2
    %s79 = scalar_lea.vmem %s2, %s78
    %s80 = sadd.s32 0, 0
    %s81 = sadd.s32 0, 0
    %p82 = scmp.lt.s32.totalorder %s81, 0
    %s83 = scalar_select %p82, %s81, 0
    %s84 = scalar_lea.vmem %s3, %s83
    %s85 = sadd.s32 0, 0
    %p86 = scmp.eq.s32.totalorder 0, 0
    // Predicated region
    $region22: #{tpu_custom_call.1} parent=1 // pred_check
      %p87 = pneg %p86
    $region23: #{tpu_custom_call.1} parent=1 // pred_check_branch
      %89 = sbr.rel (%p87) target = $region25
    $region24: #{tpu_custom_call.1} parent=1 // pred_region
      %90 = vst [vmem:[#allocation2] sm:$0x3] 0.0
      %91 = vst [vmem:[#allocation3] sm:$0x3] 0.0
      %92 = vst [vmem:[#allocation4] sm:$0x3] 0.0
    $region25: #{tpu_custom_call.1} parent=1 // pred_fallthru
      _
    %v93 = vld [vmem:[#allocation5] sm:$0x3]
    %v94 = vld [vmem:[%s73] sm:$0x3]
    %v95 = vld [vmem:[%s84] sm:$0x1]
    %v96 = vunpack.c.0.s8 %v95
    %v97 = vcvt.s32.f32 %v96
    %v98 = vld [vmem:[%s79] sm:$0x3]
    %99 = vrot.lane.b32.xlu0 %v98, 4
    %v100 = vpop.permute.xlu0 %99
    %v101 = vlaneseq
    %v102 = vand.u32 %v101, 127
    %vm103 = vcmp.ge.s32.totalorder %v102, 4
    %v104 = vsel %vm103, 1, 0
    %v105 = vcvt.s32.f32 %v104
    %v106 = vmul.f32 %v97, %v105
    %107 = vrot.lane.b32.xlu0 %v97, 4
    %v108 = vpop.permute.xlu0 %107
    %v109 = vmul.f32 %v106, %v108
    %v110 = vsub.f32 %v93, %v94
    %111 = vrot.lane.b32.xlu0 %v110, 4
    %v112 = vpop.permute.xlu0 %111
    %v113 = vsub.f32 %v110, %v112
    %v114 = vld [vmem:[#allocation2] sm:$0x3]
    %v115 = vand.u32 2147483647, %v110
    %vm116 = vcmp.lt.f32.partialorder %v115, 1.0
    %v117 = vmul.f32 %v110, 0.5
    %v118 = vmul.f32 %v117, %v110
    %v119 = vsub.f32 %v115, 0.5
    %v120 = vsel %vm116, %v118, %v119
    %v121 = vmul.f32 %v120, %v97
    %v122 = vadd.f32 %v114, %v121
    %123 = vst [vmem:[#allocation2] sm:$0x3] %v122
    %v124 = vld [vmem:[#allocation3] sm:$0x3]
    %v125 = vand.u32 2147483647, %v113
    %vm126 = vcmp.lt.f32.partialorder %v125, 1.0
    %v127 = vmul.f32 %v113, 0.5
    %v128 = vmul.f32 %v127, %v113
    %v129 = vsub.f32 %v125, 0.5
    %v130 = vsel %vm126, %v128, %v129
    %v131 = vmul.f32 %v130, %v109
    %v132 = vadd.f32 %v124, %v131
    %133 = vst [vmem:[#allocation3] sm:$0x3] %v132
    %v134 = vld [vmem:[#allocation4] sm:$0x3]
    %v135 = vsub.f32 %v100, %v94
    %v136 = vand.u32 2147483647, %v135
    %vm137 = vcmp.lt.f32.partialorder %v136, 1.0
    %v138 = vmul.f32 %v135, 0.5
    %v139 = vmul.f32 %v138, %v135
    %v140 = vsub.f32 %v136, 0.5
    %v141 = vsel %vm137, %v139, %v140
    %v142 = vmul.f32 %v141, %v106
    %v143 = vadd.f32 %v134, %v142
    %144 = vst [vmem:[#allocation4] sm:$0x3] %v143
    // Predicated region
    $region26: #{tpu_custom_call.1} parent=1 // pred_check
      %p145 = pneg %p86
    $region27: #{tpu_custom_call.1} parent=1 // pred_check_branch
      %147 = sbr.rel (%p145) target = $region29
    $region28: #{tpu_custom_call.1} parent=1 // pred_region
      %v148 = vld [vmem:[#allocation2] sm:$0x3]
      %vm149 = vcmask 1041408
      %v150 = vsel %vm149, %v148, 0.0
      %v151 = vrot.slane %v150, 4
      %v152 = vadd.f32 %v150, %v151
      %v153 = vrot.slane %v152, 2
      %v154 = vadd.f32 %v152, %v153
      %v155 = vrot.slane %v154, 1
      %v156 = vadd.f32 %v154, %v155
      %157 = vst [vmem:[#allocation8] sm:$0x1] %v156
      %v158 = vld [vmem:[#allocation3] sm:$0x3]
      %v159 = vsel %vm149, %v158, 0.0
      %v160 = vrot.slane %v159, 4
      %v161 = vadd.f32 %v159, %v160
      %v162 = vrot.slane %v161, 2
      %v163 = vadd.f32 %v161, %v162
      %v164 = vrot.slane %v163, 1
      %v165 = vadd.f32 %v163, %v164
      %166 = vst [vmem:[#allocation9] sm:$0x1] %v165
      %v167 = vld [vmem:[#allocation4] sm:$0x3]
      %v168 = vsel %vm149, %v167, 0.0
      %v169 = vrot.slane %v168, 4
      %v170 = vadd.f32 %v168, %v169
      %v171 = vrot.slane %v170, 2
      %v172 = vadd.f32 %v170, %v171
      %v173 = vrot.slane %v172, 1
      %v174 = vadd.f32 %v172, %v173
      %175 = vst [vmem:[#allocation11] sm:$0x1] %v174
    $region29: #{tpu_custom_call.1} parent=1 // pred_fallthru
      _
    // Predicated region
    $region30: #{tpu_custom_call.1} parent=1 // pred_check
      _
    $region31: #{tpu_custom_call.1} parent=1 // pred_check_branch
      %177 = sbr.rel (0) target = $region33
    $region32: #{tpu_custom_call.1} parent=1 // pred_region
      %s179 = ssub.s32 16, 16
      %180 = vsyncadd [#allocation7], %s179
      %s182 = sshll.u32 [#allocation8], 4
      %s183 = int_to_ptr.vmem [resolvable:$true] %s182
      %185 = dma.vmem_to_hbm [thread:$0]  %s183, 16, %s4, [#allocation7]
    $region33: #{tpu_custom_call.1} parent=1 // pred_fallthru
      _
    // Predicated region
    $region34: #{tpu_custom_call.1} parent=1 // pred_check
      _
    $region35: #{tpu_custom_call.1} parent=1 // pred_check_branch
      %187 = sbr.rel (0) target = $region37
    $region36: #{tpu_custom_call.1} parent=1 // pred_region
      %s189 = ssub.s32 16, 16
      %190 = vsyncadd [#allocation10], %s189
      %s192 = sshll.u32 [#allocation9], 4
      %s193 = int_to_ptr.vmem [resolvable:$true] %s192
      %195 = dma.vmem_to_hbm [thread:$0]  %s193, 16, %s5, [#allocation10]
    $region37: #{tpu_custom_call.1} parent=1 // pred_fallthru
      _
    // Predicated region
    $region38: #{tpu_custom_call.1} parent=1 // pred_check
      _
    $region39: #{tpu_custom_call.1} parent=1 // pred_check_branch
      %197 = sbr.rel (0) target = $region41
    $region40: #{tpu_custom_call.1} parent=1 // pred_region
      %s199 = ssub.s32 16, 16
      %200 = vsyncadd [#allocation10], %s199
      %s202 = sshll.u32 [#allocation11], 4
      %s203 = int_to_ptr.vmem [resolvable:$true] %s202
      %205 = dma.vmem_to_hbm [thread:$0]  %s203, 16, %s6, [#allocation10]
    $region41: #{tpu_custom_call.1} parent=1 // pred_fallthru
      _
    // Predicated region
    $region42: #{tpu_custom_call.1} parent=1 // pred_check
      _
    $region43: #{tpu_custom_call.1} parent=1 // pred_check_branch
      %207 = sbr.rel (0) target = $region45
    $region44: #{tpu_custom_call.1} parent=1 // pred_region
      %208 = dma.done [#allocation7], 16
    $region45: #{tpu_custom_call.1} parent=1 // pred_fallthru
      _
    // Predicated region
    $region46: #{tpu_custom_call.1} parent=1 // pred_check
      _
    $region47: #{tpu_custom_call.1} parent=1 // pred_check_branch
      %210 = sbr.rel (0) target = $region49
    $region48: #{tpu_custom_call.1} parent=1 // pred_region
      %211 = dma.done [#allocation10], 16
    $region49: #{tpu_custom_call.1} parent=1 // pred_fallthru
      _
    // Predicated region
    $region50: #{tpu_custom_call.1} parent=1 // pred_check
      _
    $region51: #{tpu_custom_call.1} parent=1 // pred_check_branch
      %213 = sbr.rel (0) target = $region53
    $region52: #{tpu_custom_call.1} parent=1 // pred_region
      %214 = dma.done [#allocation10], 16
    $region53: #{tpu_custom_call.1} parent=1 // pred_fallthru
      _
    %215 = vsyncpa [#allocation6], 1
    %216 = vsyncpa [#allocation7], 1
    %217 = vsyncpa [#allocation10], 1

</llo_original>
